<compile_context>
chip_gen: v7x
topology: tpu7x:2x2x1
jax: 0.10.0
libtpu: 0.0.40
codegen_flags: <defaults>
</compile_context>

<pallas_src>
import jax
import jax.numpy as jnp
from jax.experimental import pallas as pl
from jax.experimental.pallas import tpu as pltpu

INPUT_DIM = 3
IN_PAD = 8            # input features zero-padded 3 -> 8
OUTPUT_DIM = 2
HIDDEN_DIM = 64
BATCH = 256


def mlp_kernel(x_ref, wx_ref, whh_ref, w3t_ref, b_ref, b3t_ref, o_ref):
    # x_ref   : (TILE_B, IN_PAD)   f32   padded coords
    # wx_ref  : (IN_PAD, 2H)       bf16  [W0 | W2x]   (fused first pass)
    # whh_ref : (2H, H)            bf16  rows [0:H]=W1, [H:2H]=W2h
    # w3t_ref : (OUT, H)           bf16  W3^T
    # b_ref   : (2, 2H)            f32   row0=[b0 | 0], row1=[b1 | b2]
    # b3t_ref : (OUT, 1)           f32
    # o_ref   : (OUT, TILE_B)            transposed (lane-dense) output
    H = HIDDEN_DIM
    xb = x_ref[...].astype(jnp.bfloat16)

    # Fused pass: x @ [W0 | W2x] + [b0 | 0]
    #   lanes [0:H]   -> layer-0 pre-activation
    #   lanes [H:2H]  -> skip contribution x @ W2x (bias/act handled in layer 2)
    u = jnp.dot(xb, wx_ref[...], preferred_element_type=jnp.float32) + b_ref[0:1, :]
    h = jnp.maximum(u[:, 0:H], 0.0)          # ReLU(x @ W0 + b0)
    skip_x = u[:, H:2 * H]                   # x @ W2x

    # layer 1: Linear(H, H) + ReLU
    h = jnp.dot(h.astype(jnp.bfloat16), whh_ref[0:H, :],
                preferred_element_type=jnp.float32) + b_ref[1:2, 0:H]
    h = jnp.maximum(h, 0.0)

    # layer 2 with skip: cat([h, x_in]) @ W2 + b2 == h @ W2h + x_in @ W2x + b2
    h = (jnp.dot(h.astype(jnp.bfloat16), whh_ref[H:2 * H, :],
                 preferred_element_type=jnp.float32)
         + skip_x + b_ref[1:2, H:2 * H])
    h = jnp.maximum(h, 0.0)

    # layer 3, computed transposed so the output block is lane-dense:
    #   y^T = W3^T @ h^T + b3^T  -> (OUT, TILE_B)
    ht = h.T.astype(jnp.bfloat16)            # XLU transpose (H, TILE_B), ~free
    yt = jnp.dot(w3t_ref[...], ht, preferred_element_type=jnp.float32) + b3t_ref[...]
    o_ref[...] = yt.astype(o_ref.dtype)


def _full_spec(shape):
    # whole-array block, same block for every grid step
    return pl.BlockSpec(shape, lambda i: (0,) * len(shape))


def _choose_tile_b(batch):
    # Large tiles amortize the ~0.35us per-grid-step overhead; cap at 2048
    # rows so per-tile VMEM stays tiny even on v7x (64 MiB VMEM) and very
    # large batches still yield a multi-step "parallel" grid that v7x's two
    # TensorCores can split.
    return batch if batch <= 2048 else 2048


def mlp_pallas(x, params, tile_b=None):
    (w0, b0, w1, b1, w2, b2, w3, b3) = params
    H = HIDDEN_DIM
    batch = x.shape[0]
    if tile_b is None:
        tile_b = _choose_tile_b(batch)

    # Handle remainder rows by padding the batch, sliced off at the end.
    padded = pl.cdiv(batch, tile_b) * tile_b
    n_tiles = padded // tile_b

    # Pad input features 3 -> IN_PAD with zero columns (aligned loads).
    x_pad = jnp.pad(x, ((0, padded - batch), (0, IN_PAD - INPUT_DIM)))

    # ---- weight packing (once, outside the kernel) ----
    w2h, w2x = w2[:H, :], w2[H:, :]
    # fused first-pass weight: (IN_PAD, 2H) = [W0 | W2x], rows zero-padded
    wx = jnp.pad(jnp.concatenate([w0, w2x], axis=1),
                 ((0, IN_PAD - INPUT_DIM), (0, 0))).astype(jnp.bfloat16)
    # hidden->hidden weights in one slab: rows [0:H]=W1, [H:2H]=W2h
    whh = jnp.concatenate([w1, w2h], axis=0).astype(jnp.bfloat16)     # (2H, H)
    w3t = w3.T.astype(jnp.bfloat16)                                   # (OUT, H)
    # bias slab (f32): row0 = [b0 | 0] (fused pass), row1 = [b1 | b2]
    b_slab = jnp.stack([jnp.concatenate([b0, jnp.zeros_like(b0)]),
                        jnp.concatenate([b1, b2])], axis=0)           # (2, 2H)
    b3t = b3[:, None]                                                 # (OUT, 1)

    out_t = pl.pallas_call(
        mlp_kernel,
        out_shape=jax.ShapeDtypeStruct((OUTPUT_DIM, padded), x.dtype),
        grid=(n_tiles,),
        in_specs=[pl.BlockSpec((tile_b, IN_PAD), lambda i: (i, 0)),
                  _full_spec(wx.shape),
                  _full_spec(whh.shape),
                  _full_spec(w3t.shape),
                  _full_spec(b_slab.shape),
                  _full_spec(b3t.shape)],
        out_specs=pl.BlockSpec((OUTPUT_DIM, tile_b), lambda i: (0, i)),
        compiler_params=pltpu.CompilerParams(
            dimension_semantics=("parallel",)),
    )(x_pad, wx, whh, w3t, b_slab, b3t)

    # back to (batch, OUTPUT_DIM); drop padded rows
    return out_t.T[:batch]


def mlp_ref(x, params, matmul_dtype=jnp.float32):
    """Plain-JAX reference matching the PyTorch forward.

    matmul_dtype=jnp.bfloat16 mirrors the kernel's bf16-input / f32-accumulate
    matmuls; matmul_dtype=jnp.float32 is the exact module semantics.
    """
    (w0, b0, w1, b1, w2, b2, w3, b3) = params

    def dot(a, b):
        return jnp.dot(a.astype(matmul_dtype), b.astype(matmul_dtype),
                       preferred_element_type=jnp.float32)

    x_in = x
    h = jnp.maximum(dot(x, w0) + b0, 0.0)
    h = jnp.maximum(dot(h, w1) + b1, 0.0)
    h = jnp.concatenate([h, x_in], axis=-1)
    h = jnp.maximum(dot(h, w2) + b2, 0.0)
    return dot(h, w3) + b3


def init_params(key):
    """Deterministic init mimicking PyTorch nn.Linear default (U[-1/sqrt(in), 1/sqrt(in)])."""
    dims = [
        (INPUT_DIM, HIDDEN_DIM),                # layer 0
        (HIDDEN_DIM, HIDDEN_DIM),               # layer 1
        (HIDDEN_DIM + INPUT_DIM, HIDDEN_DIM),   # layer 2 (after skip concat)
        (HIDDEN_DIM, OUTPUT_DIM),               # layer 3
    ]
    params = []
    for (fan_in, fan_out) in dims:
        key, kw, kb = jax.random.split(key, 3)
        bound = 1.0 / jnp.sqrt(jnp.float32(fan_in))
        w = jax.random.uniform(kw, (fan_in, fan_out), jnp.float32, -bound, bound)
        b = jax.random.uniform(kb, (fan_out,), jnp.float32, -bound, bound)
        params += [w, b]
    return tuple(params)


if __name__ == "__main__":
    key = jax.random.PRNGKey(0)
    kx, kp = jax.random.split(key)
    x = jax.random.normal(kx, (BATCH, INPUT_DIM), jnp.float32)
    params = init_params(kp)

    out = jax.block_until_ready(mlp_pallas(x, params))
    assert out.shape == (BATCH, OUTPUT_DIM), out.shape

    # tight check vs. a reference mirroring the kernel's bf16 matmul inputs
    ref_bf16 = mlp_ref(x, params, matmul_dtype=jnp.bfloat16)
    assert jnp.allclose(out, ref_bf16, atol=5e-3, rtol=5e-3), (
        float(jnp.max(jnp.abs(out - ref_bf16))))

    # loose check vs. the exact f32 module semantics (bf16 matmul error bound)
    ref_f32 = mlp_ref(x, params, matmul_dtype=jnp.float32)
    assert jnp.allclose(out, ref_f32, atol=5e-2, rtol=5e-2), (
        float(jnp.max(jnp.abs(out - ref_f32))))

    print("KERNEL_OK")
</pallas_src>

<mosaic_0001>
module attributes {stable_mosaic.version = 11 : i64} {
  func.func @mlp_kernel(%arg0: i32, %arg1: memref<256x8xf32, #tpu.memory_space<vmem>>, %arg2: memref<8x128xbf16, #tpu.memory_space<vmem>>, %arg3: memref<128x64xbf16, #tpu.memory_space<vmem>>, %arg4: memref<2x64xbf16, #tpu.memory_space<vmem>>, %arg5: memref<2x128xf32, #tpu.memory_space<vmem>>, %arg6: memref<2x1xf32, #tpu.memory_space<vmem>>, %arg7: memref<2x256xf32, #tpu.memory_space<vmem>>) attributes {dimension_semantics = [#tpu.dimension_semantics<parallel>], iteration_bounds = array<i64: 1>, scalar_prefetch = 0 : i64, scratch_operands = 0 : i64, tpu.core_type = #tpu.core_type<tc>, window_params = [{transform_indices = @transform_0, window_bounds = array<i64: 256, 8>}, {pipeline_mode = #tpu.pipeline_mode<synchronous>, transform_indices = @transform_1, window_bounds = array<i64: 8, 128>}, {pipeline_mode = #tpu.pipeline_mode<synchronous>, transform_indices = @transform_2, window_bounds = array<i64: 128, 64>}, {pipeline_mode = #tpu.pipeline_mode<synchronous>, transform_indices = @transform_3, window_bounds = array<i64: 2, 64>}, {pipeline_mode = #tpu.pipeline_mode<synchronous>, transform_indices = @transform_4, window_bounds = array<i64: 2, 128>}, {pipeline_mode = #tpu.pipeline_mode<synchronous>, transform_indices = @transform_5, window_bounds = array<i64: 2, 1>}, {transform_indices = @transform_6, window_bounds = array<i64: 2, 256>}]} {
    %c0 = arith.constant 0 : index
    %c0_0 = arith.constant 0 : index
    %0 = vector.load %arg1[%c0, %c0_0] : memref<256x8xf32, #tpu.memory_space<vmem>>, vector<256x8xf32>
    %1 = arith.truncf %0 : vector<256x8xf32> to vector<256x8xbf16>
    %c0_1 = arith.constant 0 : index
    %c0_2 = arith.constant 0 : index
    %2 = vector.load %arg2[%c0_1, %c0_2] : memref<8x128xbf16, #tpu.memory_space<vmem>>, vector<8x128xbf16>
    %cst = arith.constant dense<0.000000e+00> : vector<256x128xf32>
    %3 = tpu.matmul %1, %2, %cst {dimension_numbers = #tpu.dot_dimension_numbers<[1], [0], [0], [1], [0, 0, 1, 1], [], []>} : vector<256x8xbf16>, vector<8x128xbf16>, vector<256x128xf32> -> vector<256x128xf32>
    %c0_3 = arith.constant 0 : index
    %c0_4 = arith.constant 0 : index
    %4 = vector.load %arg5[%c0_3, %c0_4] : memref<2x128xf32, #tpu.memory_space<vmem>>, vector<1x128xf32>
    %5 = vector.broadcast %4 : vector<1x128xf32> to vector<256x128xf32>
    %6 = arith.addf %3, %5 : vector<256x128xf32>
    %7 = vector.extract_strided_slice %6 {offsets = [0, 0], sizes = [256, 64], strides = [1, 1]} : vector<256x128xf32> to vector<256x64xf32>
    %cst_5 = arith.constant 0.000000e+00 : f32
    %8 = vector.broadcast %cst_5 : f32 to vector<256x64xf32>
    %9 = arith.maximumf %7, %8 : vector<256x64xf32>
    %10 = vector.extract_strided_slice %6 {offsets = [0, 64], sizes = [256, 64], strides = [1, 1]} : vector<256x128xf32> to vector<256x64xf32>
    %11 = arith.truncf %9 : vector<256x64xf32> to vector<256x64xbf16>
    %c0_6 = arith.constant 0 : index
    %c0_7 = arith.constant 0 : index
    %12 = vector.load %arg3[%c0_6, %c0_7] : memref<128x64xbf16, #tpu.memory_space<vmem>>, vector<64x64xbf16>
    %cst_8 = arith.constant dense<0.000000e+00> : vector<256x64xf32>
    %13 = tpu.matmul %11, %12, %cst_8 {dimension_numbers = #tpu.dot_dimension_numbers<[1], [0], [0], [1], [0, 0, 1, 1], [], []>} : vector<256x64xbf16>, vector<64x64xbf16>, vector<256x64xf32> -> vector<256x64xf32>
    %c1 = arith.constant 1 : index
    %c0_9 = arith.constant 0 : index
    %14 = vector.load %arg5[%c1, %c0_9] : memref<2x128xf32, #tpu.memory_space<vmem>>, vector<1x64xf32>
    %15 = vector.broadcast %14 : vector<1x64xf32> to vector<256x64xf32>
    %16 = arith.addf %13, %15 : vector<256x64xf32>
    %cst_10 = arith.constant 0.000000e+00 : f32
    %17 = vector.broadcast %cst_10 : f32 to vector<256x64xf32>
    %18 = arith.maximumf %16, %17 : vector<256x64xf32>
    %19 = arith.truncf %18 : vector<256x64xf32> to vector<256x64xbf16>
    %c64 = arith.constant 64 : index
    %c0_11 = arith.constant 0 : index
    %20 = vector.load %arg3[%c64, %c0_11] : memref<128x64xbf16, #tpu.memory_space<vmem>>, vector<64x64xbf16>
    %cst_12 = arith.constant dense<0.000000e+00> : vector<256x64xf32>
    %21 = tpu.matmul %19, %20, %cst_12 {dimension_numbers = #tpu.dot_dimension_numbers<[1], [0], [0], [1], [0, 0, 1, 1], [], []>} : vector<256x64xbf16>, vector<64x64xbf16>, vector<256x64xf32> -> vector<256x64xf32>
    %22 = arith.addf %21, %10 : vector<256x64xf32>
    %c1_13 = arith.constant 1 : index
    %c64_14 = arith.constant 64 : index
    %23 = vector.load %arg5[%c1_13, %c64_14] : memref<2x128xf32, #tpu.memory_space<vmem>>, vector<1x64xf32>
    %24 = vector.broadcast %23 : vector<1x64xf32> to vector<256x64xf32>
    %25 = arith.addf %22, %24 : vector<256x64xf32>
    %cst_15 = arith.constant 0.000000e+00 : f32
    %26 = vector.broadcast %cst_15 : f32 to vector<256x64xf32>
    %27 = arith.maximumf %25, %26 : vector<256x64xf32>
    %28 = tpu.transpose %27, [1, 0] : vector<256x64xf32> -> vector<64x256xf32>
    %29 = arith.truncf %28 : vector<64x256xf32> to vector<64x256xbf16>
    %c0_16 = arith.constant 0 : index
    %c0_17 = arith.constant 0 : index
    %30 = vector.load %arg4[%c0_16, %c0_17] : memref<2x64xbf16, #tpu.memory_space<vmem>>, vector<2x64xbf16>
    %cst_18 = arith.constant dense<0.000000e+00> : vector<2x256xf32>
    %31 = tpu.matmul %30, %29, %cst_18 {dimension_numbers = #tpu.dot_dimension_numbers<[1], [0], [0], [1], [0, 0, 1, 1], [], []>} : vector<2x64xbf16>, vector<64x256xbf16>, vector<2x256xf32> -> vector<2x256xf32>
    %c0_19 = arith.constant 0 : index
    %c0_20 = arith.constant 0 : index
    %32 = vector.load %arg6[%c0_19, %c0_20] : memref<2x1xf32, #tpu.memory_space<vmem>>, vector<2x1xf32>
    %33 = vector.broadcast %32 : vector<2x1xf32> to vector<2x256xf32>
    %34 = arith.addf %31, %33 : vector<2x256xf32>
    %c0_21 = arith.constant 0 : index
    %c0_22 = arith.constant 0 : index
    %35 = vector.load %arg7[%c0_21, %c0_22] : memref<2x256xf32, #tpu.memory_space<vmem>>, vector<2x256xf32>
    tpu.vector_store %arg7[%c0_21, %c0_22], %34 {strides = array<i32>} : memref<2x256xf32, #tpu.memory_space<vmem>>, vector<2x256xf32>,
    return
  }
  func.func @transform_0(%arg0: i32) -> (i32, i32) {
    %c0_i32 = arith.constant 0 : i32
    %c0_i32_0 = arith.constant 0 : i32
    return %arg0, %c0_i32 : i32, i32
  }
  func.func @transform_1(%arg0: i32) -> (i32, i32) {
    %c0_i32 = arith.constant 0 : i32
    %c0_i32_0 = arith.constant 0 : i32
    %c0_i32_1 = arith.constant 0 : i32
    return %c0_i32, %c0_i32_0 : i32, i32
  }
  func.func @transform_2(%arg0: i32) -> (i32, i32) {
    %c0_i32 = arith.constant 0 : i32
    %c0_i32_0 = arith.constant 0 : i32
    %c0_i32_1 = arith.constant 0 : i32
    return %c0_i32, %c0_i32_0 : i32, i32
  }
  func.func @transform_3(%arg0: i32) -> (i32, i32) {
    %c0_i32 = arith.constant 0 : i32
    %c0_i32_0 = arith.constant 0 : i32
    %c0_i32_1 = arith.constant 0 : i32
    return %c0_i32, %c0_i32_0 : i32, i32
  }
  func.func @transform_4(%arg0: i32) -> (i32, i32) {
    %c0_i32 = arith.constant 0 : i32
    %c0_i32_0 = arith.constant 0 : i32
    %c0_i32_1 = arith.constant 0 : i32
    return %c0_i32, %c0_i32_0 : i32, i32
  }
  func.func @transform_5(%arg0: i32) -> (i32, i32) {
    %c0_i32 = arith.constant 0 : i32
    %c0_i32_0 = arith.constant 0 : i32
    %c0_i32_1 = arith.constant 0 : i32
    return %c0_i32, %c0_i32_0 : i32, i32
  }
  func.func @transform_6(%arg0: i32) -> (i32, i32) {
    %c0_i32 = arith.constant 0 : i32
    %c0_i32_0 = arith.constant 0 : i32
    return %c0_i32, %arg0 : i32, i32
  }
}

</mosaic_0001>

<llo_original>
// kernel: tpu_custom_call.1
$region0: #{tpu_custom_call.1}
  #allocation0 [shape = 'u32[]', space=smem, size = 0x4, offset = 0x4, fixed_abs, tag = 'smem constant byte address 0x4 - core index']
  #allocation1 [shape = 'u32[144,128]{1,0:T(1,128)}', space=vmem, size = 0x12000, scoped, tag = 'internal scratch']
  %s0 = inlined_call_operand.vmem [shape: f32[256,8], index: 0, kind: input, shape index: {}]
  %s1 = inlined_call_operand.vmem [shape: bf16[8,128], index: 1, kind: input, shape index: {}]
  %s2 = inlined_call_operand.vmem [shape: bf16[128,64], index: 2, kind: input, shape index: {}]
  %s3 = inlined_call_operand.vmem [shape: bf16[2,64], index: 3, kind: input, shape index: {}]
  %s4 = inlined_call_operand.vmem [shape: f32[2,128], index: 4, kind: input, shape index: {}]
  %s5 = inlined_call_operand.vmem [shape: f32[2,1], index: 5, kind: input, shape index: {}]
  %s6 = inlined_call_operand.hbm [shape: f32[2,256], index: 6, kind: output, shape index: {}]
  %s7 = sld [smem:[#allocation0]]
  $region34: #{tpu_custom_call.1} parent=0
    _
  %s9 = ssub.s32 1, %s7
  %s10 = scalar_select 0, %s9, %s7
  $region1: #{tpu_custom_call.1} parent=0
    #allocation2 [shape = 'u8[2048]{0}', space=vmem, size = 0x800, scoped, tag = 'output window, operand 0, single buffered']
    #allocation3 [shape = 's32[1]{0}', space=sflag, size = 0x4, scoped, tag = 'scoped memory for tpu_custom_call.1']
    %11 = vsyncpa [#allocation3], 0
    // Predicated region
    $region2: #{tpu_custom_call.1} parent=1 // pred_check
      _
    $region3: #{tpu_custom_call.1} parent=1 // pred_check_branch
      %13 = sbr.rel (0) target = $region5
    $region4: #{tpu_custom_call.1} parent=1 // pred_region
      _
    $region5: #{tpu_custom_call.1} parent=1 // pred_fallthru
      _
    // Predicated region
    $region6: #{tpu_custom_call.1} parent=1 // pred_check
      _
    $region7: #{tpu_custom_call.1} parent=1 // pred_check_branch
      %15 = sbr.rel (0) target = $region9
    $region8: #{tpu_custom_call.1} parent=1 // pred_region
      _
    $region9: #{tpu_custom_call.1} parent=1 // pred_fallthru
      _
    // Predicated region
    $region10: #{tpu_custom_call.1} parent=1 // pred_check
      _
    $region11: #{tpu_custom_call.1} parent=1 // pred_check_branch
      %17 = sbr.rel (0) target = $region13
    $region12: #{tpu_custom_call.1} parent=1 // pred_region
      _
    $region13: #{tpu_custom_call.1} parent=1 // pred_fallthru
      _
    // Predicated region
    $region14: #{tpu_custom_call.1} parent=1 // pred_check
      _
    $region15: #{tpu_custom_call.1} parent=1 // pred_check_branch
      %19 = sbr.rel (0) target = $region17
    $region16: #{tpu_custom_call.1} parent=1 // pred_region
      _
    $region17: #{tpu_custom_call.1} parent=1 // pred_fallthru
      _
    // Predicated region
    $region18: #{tpu_custom_call.1} parent=1 // pred_check
      _
    $region19: #{tpu_custom_call.1} parent=1 // pred_check_branch
      %21 = sbr.rel (0) target = $region21
    $region20: #{tpu_custom_call.1} parent=1 // pred_region
      _
    $region21: #{tpu_custom_call.1} parent=1 // pred_fallthru
      _
    // Predicated region
    $region22: #{tpu_custom_call.1} parent=1 // pred_check
      _
    $region23: #{tpu_custom_call.1} parent=1 // pred_check_branch
      %23 = sbr.rel (0) target = $region25
    $region24: #{tpu_custom_call.1} parent=1 // pred_region
      _
    $region25: #{tpu_custom_call.1} parent=1 // pred_fallthru
      _
    %v25 = vld [vmem:[%s0] sm:$0xff]
    %v26 = vld [vmem:[%s0 + $0x8] sm:$0xff]
    %v27 = vld [vmem:[%s0 + $0x10] sm:$0xff]
    %v28 = vld [vmem:[%s0 + $0x18] sm:$0xff]
    %v29 = vld [vmem:[%s0 + $0x20] sm:$0xff]
    %v30 = vld [vmem:[%s0 + $0x28] sm:$0xff]
    %v31 = vld [vmem:[%s0 + $0x30] sm:$0xff]
    %v32 = vld [vmem:[%s0 + $0x38] sm:$0xff]
    %v33 = vld [vmem:[%s0 + $0x40] sm:$0xff]
    %v34 = vld [vmem:[%s0 + $0x48] sm:$0xff]
    %v35 = vld [vmem:[%s0 + $0x50] sm:$0xff]
    %v36 = vld [vmem:[%s0 + $0x58] sm:$0xff]
    %v37 = vld [vmem:[%s0 + $0x60] sm:$0xff]
    %v38 = vld [vmem:[%s0 + $0x68] sm:$0xff]
    %v39 = vld [vmem:[%s0 + $0x70] sm:$0xff]
    %v40 = vld [vmem:[%s0 + $0x78] sm:$0xff]
    %v41 = vld [vmem:[%s0 + $0x80] sm:$0xff]
    %v42 = vld [vmem:[%s0 + $0x88] sm:$0xff]
    %v43 = vld [vmem:[%s0 + $0x90] sm:$0xff]
    %v44 = vld [vmem:[%s0 + $0x98] sm:$0xff]
    %v45 = vld [vmem:[%s0 + $0xa0] sm:$0xff]
    %v46 = vld [vmem:[%s0 + $0xa8] sm:$0xff]
    %v47 = vld [vmem:[%s0 + $0xb0] sm:$0xff]
    %v48 = vld [vmem:[%s0 + $0xb8] sm:$0xff]
    %v49 = vld [vmem:[%s0 + $0xc0] sm:$0xff]
    %v50 = vld [vmem:[%s0 + $0xc8] sm:$0xff]
    %v51 = vld [vmem:[%s0 + $0xd0] sm:$0xff]
    %v52 = vld [vmem:[%s0 + $0xd8] sm:$0xff]
    %v53 = vld [vmem:[%s0 + $0xe0] sm:$0xff]
    %v54 = vld [vmem:[%s0 + $0xe8] sm:$0xff]
    %v55 = vld [vmem:[%s0 + $0xf0] sm:$0xff]
    %v56 = vld [vmem:[%s0 + $0xf8] sm:$0xff]
    %v57 = vpack.c.bf16 %v26, %v25
    %v58 = vpack.c.bf16 %v28, %v27
    %v59 = vpack.c.bf16 %v30, %v29
    %v60 = vpack.c.bf16 %v32, %v31
    %v61 = vpack.c.bf16 %v34, %v33
    %v62 = vpack.c.bf16 %v36, %v35
    %v63 = vpack.c.bf16 %v38, %v37
    %v64 = vpack.c.bf16 %v40, %v39
    %v65 = vpack.c.bf16 %v42, %v41
    %v66 = vpack.c.bf16 %v44, %v43
    %v67 = vpack.c.bf16 %v46, %v45
    %v68 = vpack.c.bf16 %v48, %v47
    %v69 = vpack.c.bf16 %v50, %v49
    %v70 = vpack.c.bf16 %v52, %v51
    %v71 = vpack.c.bf16 %v54, %v53
    %v72 = vpack.c.bf16 %v56, %v55
    %v73 = vld [vmem:[%s1] sm:$0xf]
    %v74 = vld [vmem:[%s4] sm:$0x1]
    %v75 = vlaneseq
    %v76 = vshrl.u32 %v75, 7
    %v77 = vsub.s32 0, %v76
    %v78 = vrot.slane %v74, %v77
    %vm79 = vcmask 64512
    %v81 = vsel %vm79, %v57, 0
    %v84 = vsel %vm79, %v58, 0
    %v87 = vsel %vm79, %v59, 0
    %v90 = vsel %vm79, %v60, 0
    %v93 = vsel %vm79, %v61, 0
    %v96 = vsel %vm79, %v62, 0
    %v99 = vsel %vm79, %v63, 0
    %v102 = vsel %vm79, %v64, 0
    %v105 = vsel %vm79, %v65, 0
    %v108 = vsel %vm79, %v66, 0
    %v111 = vsel %vm79, %v67, 0
    %v114 = vsel %vm79, %v68, 0
    %v117 = vsel %vm79, %v69, 0
    %v120 = vsel %vm79, %v70, 0
    %v123 = vsel %vm79, %v71, 0
    %v126 = vsel %vm79, %v72, 0
    %vm128 = vcmask 1043456
    %v130 = vsel %vm128, %v73, 0
    %132 = vmatprep.subr.bf16.mxu0 0
    %133 = vmatpush1.bf16.msra.mxu0 %v130
    %134 = vmatprep.subr.bf16.mxu0 0
    %135 = vmatpush1.bf16.msra.mxu0 0
    %136 = vmatprep.subr.bf16.mxu0 0
    %137 = vmatpush1.bf16.msra.mxu0 0
    %138 = vmatprep.subr.bf16.mxu0 0
    %139 = vmatpush1.bf16.msra.mxu0 0
    %140 = vmatprep.subr.bf16.mxu0 0
    %141 = vmatpush1.bf16.msra.mxu0 0
    %142 = vmatprep.subr.bf16.mxu0 0
    %143 = vmatpush1.bf16.msra.mxu0 0
    %144 = vmatprep.subr.bf16.mxu0 0
    %145 = vmatpush1.bf16.msra.mxu0 0
    %146 = vmatprep.subr.bf16.mxu0 0
    %147 = vmatpush1.bf16.msra.mxu0 0
    %148 = vmatprep.subr.bf16.mxu0 0
    %149 = vmatpush1.bf16.msra.mxu0 0
    %150 = vmatprep.subr.bf16.mxu0 0
    %151 = vmatpush1.bf16.msra.mxu0 0
    %152 = vmatprep.subr.bf16.mxu0 0
    %153 = vmatpush1.bf16.msra.mxu0 0
    %154 = vmatprep.subr.bf16.mxu0 0
    %155 = vmatpush1.bf16.msra.mxu0 0
    %156 = vmatprep.subr.bf16.mxu0 0
    %157 = vmatpush1.bf16.msra.mxu0 0
    %158 = vmatprep.subr.bf16.mxu0 0
    %159 = vmatpush1.bf16.msra.mxu0 0
    %160 = vmatprep.subr.bf16.mxu0 0
    %161 = vmatpush1.bf16.msra.mxu0 0
    %162 = vmatprep.subr.bf16.mxu0 0
    %163 = vmatpush1.bf16.msra.mxu0 0
    %164 = vmatprep.mubr.bf16.mxu0 0
    %165 = vmatmul.mubr.bf16.gmra.mrb[0].mxu0 %v81
    %v166 = vpop.f32.mrb[0].mxu0
    %v167 = vadd.f32 %v78, %v166
    %v168 = vpop.f32.mrb[0].mxu0
    %v169 = vpop.f32.mrb[0].mxu0
    %v170 = vadd.f32 %v78, %v169
    %v171 = vpop.f32.mrb[0].mxu0
    %172 = vmatprep.mubr.bf16.mxu0 0
    %173 = vmatmul.mubr.bf16.gmra.mrb[0].mxu0 %v84
    %v174 = vpop.f32.mrb[0].mxu0
    %v175 = vadd.f32 %v78, %v174
    %v176 = vpop.f32.mrb[0].mxu0
    %v177 = vpop.f32.mrb[0].mxu0
    %v178 = vadd.f32 %v78, %v177
    %v179 = vpop.f32.mrb[0].mxu0
    %180 = vmatprep.mubr.bf16.mxu0 0
    %181 = vmatmul.mubr.bf16.gmra.mrb[0].mxu0 %v87
    %v182 = vpop.f32.mrb[0].mxu0
    %v183 = vadd.f32 %v78, %v182
    %v184 = vpop.f32.mrb[0].mxu0
    %v185 = vpop.f32.mrb[0].mxu0
    %v186 = vadd.f32 %v78, %v185
    %v187 = vpop.f32.mrb[0].mxu0
    %188 = vmatprep.mubr.bf16.mxu0 0
    %189 = vmatmul.mubr.bf16.gmra.mrb[0].mxu0 %v90
    %v190 = vpop.f32.mrb[0].mxu0
    %v191 = vadd.f32 %v78, %v190
    %v192 = vpop.f32.mrb[0].mxu0
    %v193 = vpop.f32.mrb[0].mxu0
    %v194 = vadd.f32 %v78, %v193
    %v195 = vpop.f32.mrb[0].mxu0
    %196 = vmatprep.mubr.bf16.mxu0 0
    %197 = vmatmul.mubr.bf16.gmra.mrb[0].mxu0 %v93
    %v198 = vpop.f32.mrb[0].mxu0
    %v199 = vadd.f32 %v78, %v198
    %v200 = vpop.f32.mrb[0].mxu0
    %v201 = vpop.f32.mrb[0].mxu0
    %v202 = vadd.f32 %v78, %v201
    %v203 = vpop.f32.mrb[0].mxu0
    %204 = vmatprep.mubr.bf16.mxu0 0
    %205 = vmatmul.mubr.bf16.gmra.mrb[0].mxu0 %v96
    %v206 = vpop.f32.mrb[0].mxu0
    %v207 = vadd.f32 %v78, %v206
    %v208 = vpop.f32.mrb[0].mxu0
    %v209 = vpop.f32.mrb[0].mxu0
    %v210 = vadd.f32 %v78, %v209
    %v211 = vpop.f32.mrb[0].mxu0
    %212 = vmatprep.mubr.bf16.mxu0 0
    %213 = vmatmul.mubr.bf16.gmra.mrb[0].mxu0 %v99
    %v214 = vpop.f32.mrb[0].mxu0
    %v215 = vadd.f32 %v78, %v214
    %v216 = vpop.f32.mrb[0].mxu0
    %v217 = vpop.f32.mrb[0].mxu0
    %v218 = vadd.f32 %v78, %v217
    %v219 = vpop.f32.mrb[0].mxu0
    %220 = vmatprep.mubr.bf16.mxu0 0
    %221 = vmatmul.mubr.bf16.gmra.mrb[0].mxu0 %v102
    %v222 = vpop.f32.mrb[0].mxu0
    %v223 = vadd.f32 %v78, %v222
    %v224 = vpop.f32.mrb[0].mxu0
    %v225 = vpop.f32.mrb[0].mxu0
    %v226 = vadd.f32 %v78, %v225
    %v227 = vpop.f32.mrb[0].mxu0
    %228 = vmatprep.mubr.bf16.mxu0 0
    %229 = vmatmul.mubr.bf16.gmra.mrb[0].mxu0 %v105
    %v230 = vpop.f32.mrb[0].mxu0
    %v231 = vadd.f32 %v78, %v230
    %v232 = vpop.f32.mrb[0].mxu0
    %v233 = vpop.f32.mrb[0].mxu0
    %v234 = vadd.f32 %v78, %v233
    %v235 = vpop.f32.mrb[0].mxu0
    %236 = vmatprep.mubr.bf16.mxu0 0
    %237 = vmatmul.mubr.bf16.gmra.mrb[0].mxu0 %v108
    %v238 = vpop.f32.mrb[0].mxu0
    %v239 = vadd.f32 %v78, %v238
    %v240 = vpop.f32.mrb[0].mxu0
    %v241 = vpop.f32.mrb[0].mxu0
    %v242 = vadd.f32 %v78, %v241
    %v243 = vpop.f32.mrb[0].mxu0
    %244 = vmatprep.mubr.bf16.mxu0 0
    %245 = vmatmul.mubr.bf16.gmra.mrb[0].mxu0 %v111
    %v246 = vpop.f32.mrb[0].mxu0
    %v247 = vadd.f32 %v78, %v246
    %v248 = vpop.f32.mrb[0].mxu0
    %v249 = vpop.f32.mrb[0].mxu0
    %v250 = vadd.f32 %v78, %v249
    %v251 = vpop.f32.mrb[0].mxu0
    %252 = vmatprep.mubr.bf16.mxu0 0
    %253 = vmatmul.mubr.bf16.gmra.mrb[0].mxu0 %v114
    %v254 = vpop.f32.mrb[0].mxu0
    %v255 = vadd.f32 %v78, %v254
    %v256 = vpop.f32.mrb[0].mxu0
    %v257 = vpop.f32.mrb[0].mxu0
    %v258 = vadd.f32 %v78, %v257
    %v259 = vpop.f32.mrb[0].mxu0
    %260 = vmatprep.mubr.bf16.mxu0 0
    %261 = vmatmul.mubr.bf16.gmra.mrb[0].mxu0 %v117
    %v262 = vpop.f32.mrb[0].mxu0
    %v263 = vadd.f32 %v78, %v262
    %v264 = vpop.f32.mrb[0].mxu0
    %v265 = vpop.f32.mrb[0].mxu0
    %v266 = vadd.f32 %v78, %v265
    %v267 = vpop.f32.mrb[0].mxu0
    %268 = vmatprep.mubr.bf16.mxu0 0
    %269 = vmatmul.mubr.bf16.gmra.mrb[0].mxu0 %v120
    %v270 = vpop.f32.mrb[0].mxu0
    %v271 = vadd.f32 %v78, %v270
    %v272 = vpop.f32.mrb[0].mxu0
    %v273 = vpop.f32.mrb[0].mxu0
    %v274 = vadd.f32 %v78, %v273
    %v275 = vpop.f32.mrb[0].mxu0
    %276 = vmatprep.mubr.bf16.mxu0 0
    %277 = vmatmul.mubr.bf16.gmra.mrb[0].mxu0 %v123
    %v278 = vpop.f32.mrb[0].mxu0
    %v279 = vadd.f32 %v78, %v278
    %v280 = vpop.f32.mrb[0].mxu0
    %v281 = vpop.f32.mrb[0].mxu0
    %v282 = vadd.f32 %v78, %v281
    %v283 = vpop.f32.mrb[0].mxu0
    %284 = vmatprep.mubr.bf16.mxu0 0
    %285 = vmatmul.mubr.bf16.gmra.mrb[0].mxu0 %v126
    %v286 = vpop.f32.mrb[0].mxu0
    %v287 = vadd.f32 %v78, %v286
    %v288 = vpop.f32.mrb[0].mxu0
    %v289 = vpop.f32.mrb[0].mxu0
    %v290 = vadd.f32 %v78, %v289
    %v291 = vpop.f32.mrb[0].mxu0
    %292 = vdwg.mxu0
    %v293 = vmax.f32 %v167, 0.0
    %v294 = vmax.f32 %v170, 0.0
    %v295 = vmax.f32 %v175, 0.0
    %v296 = vmax.f32 %v178, 0.0
    %v297 = vmax.f32 %v183, 0.0
    %v298 = vmax.f32 %v186, 0.0
    %v299 = vmax.f32 %v191, 0.0
    %v300 = vmax.f32 %v194, 0.0
    %v301 = vmax.f32 %v199, 0.0
    %v302 = vmax.f32 %v202, 0.0
    %v303 = vmax.f32 %v207, 0.0
    %v304 = vmax.f32 %v210, 0.0
    %v305 = vmax.f32 %v215, 0.0
    %v306 = vmax.f32 %v218, 0.0
    %v307 = vmax.f32 %v223, 0.0
    %v308 = vmax.f32 %v226, 0.0
    %v309 = vmax.f32 %v231, 0.0
    %v310 = vmax.f32 %v234, 0.0
    %v311 = vmax.f32 %v239, 0.0
    %v312 = vmax.f32 %v242, 0.0
    %v313 = vmax.f32 %v247, 0.0
    %v314 = vmax.f32 %v250, 0.0
    %v315 = vmax.f32 %v255, 0.0
    %v316 = vmax.f32 %v258, 0.0
    %v317 = vmax.f32 %v263, 0.0
    %v318 = vmax.f32 %v266, 0.0
    %v319 = vmax.f32 %v271, 0.0
    %v320 = vmax.f32 %v274, 0.0
    %v321 = vmax.f32 %v279, 0.0
    %v322 = vmax.f32 %v282, 0.0
    %v323 = vmax.f32 %v287, 0.0
    %v324 = vmax.f32 %v290, 0.0
    %v325 = vpack.c.bf16 %v294, %v293
    %v326 = vpack.c.bf16 %v296, %v295
    %v327 = vpack.c.bf16 %v298, %v297
    %v328 = vpack.c.bf16 %v300, %v299
    %v329 = vpack.c.bf16 %v302, %v301
    %v330 = vpack.c.bf16 %v304, %v303
    %v331 = vpack.c.bf16 %v306, %v305
    %v332 = vpack.c.bf16 %v308, %v307
    %v333 = vpack.c.bf16 %v310, %v309
    %v334 = vpack.c.bf16 %v312, %v311
    %v335 = vpack.c.bf16 %v314, %v313
    %v336 = vpack.c.bf16 %v316, %v315
    %v337 = vpack.c.bf16 %v318, %v317
    %v338 = vpack.c.bf16 %v320, %v319
    %v339 = vpack.c.bf16 %v322, %v321
    %v340 = vpack.c.bf16 %v324, %v323
    %v341 = vld [vmem:[%s2] sm:$0xf]
    %v342 = vld [vmem:[%s2 + $0x4] sm:$0xf]
    %v343 = vld [vmem:[%s2 + $0x8] sm:$0xf]
    %v344 = vld [vmem:[%s2 + $0xc] sm:$0xf]
    %v345 = vld [vmem:[%s2 + $0x10] sm:$0xf]
    %v346 = vld [vmem:[%s2 + $0x14] sm:$0xf]
    %v347 = vld [vmem:[%s2 + $0x18] sm:$0xf]
    %v348 = vld [vmem:[%s2 + $0x1c] sm:$0xf]
    %v349 = vld [vmem:[%s4 + $0x1] sm:$0x1]
    %v350 = vlaneseq
    %v351 = vshrl.u32 %v350, 7
    %v352 = vsub.s32 0, %v351
    %v353 = vrot.slane %v349, %v352
    %v362 = vunpack.c.l.b16 %v341
    %v363 = vunpack.c.l.b16 %v342
    %v364 = vunpack.c.l.b16 %v343
    %v365 = vunpack.c.l.b16 %v344
    %v366 = vunpack.c.l.b16 %v345
    %v367 = vunpack.c.l.b16 %v346
    %v368 = vunpack.c.l.b16 %v347
    %v369 = vunpack.c.l.b16 %v348
    %v370 = vpack.c.b16 %v363, %v362
    %v371 = vpack.c.b16 %v365, %v364
    %v372 = vpack.c.b16 %v367, %v366
    %v373 = vpack.c.b16 %v369, %v368
    %vm378 = vcmask 523264
    %v380 = vsel %vm378, %v325, 0
    %v383 = vsel %vm378, %v326, 0
    %v386 = vsel %vm378, %v327, 0
    %v389 = vsel %vm378, %v328, 0
    %v392 = vsel %vm378, %v329, 0
    %v395 = vsel %vm378, %v330, 0
    %v398 = vsel %vm378, %v331, 0
    %v401 = vsel %vm378, %v332, 0
    %v404 = vsel %vm378, %v333, 0
    %v407 = vsel %vm378, %v334, 0
    %v410 = vsel %vm378, %v335, 0
    %v413 = vsel %vm378, %v336, 0
    %v416 = vsel %vm378, %v337, 0
    %v419 = vsel %vm378, %v338, 0
    %v422 = vsel %vm378, %v339, 0
    %v425 = vsel %vm378, %v340, 0
    %427 = vmatprep.subr.bf16.mxu0 0
    %428 = vmatpush1.bf16.msra.mxu0 %v370
    %429 = vmatprep.subr.bf16.mxu0 0
    %430 = vmatpush1.bf16.msra.mxu0 %v371
    %431 = vmatprep.subr.bf16.mxu0 0
    %432 = vmatpush1.bf16.msra.mxu0 %v372
    %433 = vmatprep.subr.bf16.mxu0 0
    %434 = vmatpush1.bf16.msra.mxu0 %v373
    %435 = vmatprep.subr.bf16.mxu0 0
    %436 = vmatpush1.bf16.msra.mxu0 0
    %437 = vmatprep.subr.bf16.mxu0 0
    %438 = vmatpush1.bf16.msra.mxu0 0
    %439 = vmatprep.subr.bf16.mxu0 0
    %440 = vmatpush1.bf16.msra.mxu0 0
    %441 = vmatprep.subr.bf16.mxu0 0
    %442 = vmatpush1.bf16.msra.mxu0 0
    %443 = vmatprep.subr.bf16.mxu0 0
    %444 = vmatpush1.bf16.msra.mxu0 0
    %445 = vmatprep.subr.bf16.mxu0 0
    %446 = vmatpush1.bf16.msra.mxu0 0
    %447 = vmatprep.subr.bf16.mxu0 0
    %448 = vmatpush1.bf16.msra.mxu0 0
    %449 = vmatprep.subr.bf16.mxu0 0
    %450 = vmatpush1.bf16.msra.mxu0 0
    %451 = vmatprep.subr.bf16.mxu0 0
    %452 = vmatpush1.bf16.msra.mxu0 0
    %453 = vmatprep.subr.bf16.mxu0 0
    %454 = vmatpush1.bf16.msra.mxu0 0
    %455 = vmatprep.subr.bf16.mxu0 0
    %456 = vmatpush1.bf16.msra.mxu0 0
    %457 = vmatprep.subr.bf16.mxu0 0
    %458 = vmatpush1.bf16.msra.mxu0 0
    %459 = vmatprep.mubr.bf16.mxu0 0
    %460 = vmatmul.mubr.bf16.gmra.mrb[0].mxu0 %v380
    %v461 = vpop.f32.mrb[0].mxu0
    %v462 = vadd.f32 %v353, %v461
    %v463 = vpop.f32.mrb[0].mxu0
    %v464 = vpop.f32.mrb[0].mxu0
    %v465 = vadd.f32 %v353, %v464
    %v466 = vpop.f32.mrb[0].mxu0
    %467 = vmatprep.mubr.bf16.mxu0 0
    %468 = vmatmul.mubr.bf16.gmra.mrb[0].mxu0 %v383
    %v469 = vpop.f32.mrb[0].mxu0
    %v470 = vadd.f32 %v353, %v469
    %v471 = vpop.f32.mrb[0].mxu0
    %v472 = vpop.f32.mrb[0].mxu0
    %v473 = vadd.f32 %v353, %v472
    %v474 = vpop.f32.mrb[0].mxu0
    %475 = vmatprep.mubr.bf16.mxu0 0
    %476 = vmatmul.mubr.bf16.gmra.mrb[0].mxu0 %v386
    %v477 = vpop.f32.mrb[0].mxu0
    %v478 = vadd.f32 %v353, %v477
    %v479 = vpop.f32.mrb[0].mxu0
    %v480 = vpop.f32.mrb[0].mxu0
    %v481 = vadd.f32 %v353, %v480
    %v482 = vpop.f32.mrb[0].mxu0
    %483 = vmatprep.mubr.bf16.mxu0 0
    %484 = vmatmul.mubr.bf16.gmra.mrb[0].mxu0 %v389
    %v485 = vpop.f32.mrb[0].mxu0
    %v486 = vadd.f32 %v353, %v485
    %v487 = vpop.f32.mrb[0].mxu0
    %v488 = vpop.f32.mrb[0].mxu0
    %v489 = vadd.f32 %v353, %v488
    %v490 = vpop.f32.mrb[0].mxu0
    %491 = vmatprep.mubr.bf16.mxu0 0
    %492 = vmatmul.mubr.bf16.gmra.mrb[0].mxu0 %v392
    %v493 = vpop.f32.mrb[0].mxu0
    %v494 = vadd.f32 %v353, %v493
    %v495 = vpop.f32.mrb[0].mxu0
    %v496 = vpop.f32.mrb[0].mxu0
    %v497 = vadd.f32 %v353, %v496
    %v498 = vpop.f32.mrb[0].mxu0
    %499 = vmatprep.mubr.bf16.mxu0 0
    %500 = vmatmul.mubr.bf16.gmra.mrb[0].mxu0 %v395
    %v501 = vpop.f32.mrb[0].mxu0
    %v502 = vadd.f32 %v353, %v501
    %v503 = vpop.f32.mrb[0].mxu0
    %v504 = vpop.f32.mrb[0].mxu0
    %v505 = vadd.f32 %v353, %v504
    %v506 = vpop.f32.mrb[0].mxu0
    %507 = vmatprep.mubr.bf16.mxu0 0
    %508 = vmatmul.mubr.bf16.gmra.mrb[0].mxu0 %v398
    %v509 = vpop.f32.mrb[0].mxu0
    %v510 = vadd.f32 %v353, %v509
    %v511 = vpop.f32.mrb[0].mxu0
    %v512 = vpop.f32.mrb[0].mxu0
    %v513 = vadd.f32 %v353, %v512
    %v514 = vpop.f32.mrb[0].mxu0
    %515 = vmatprep.mubr.bf16.mxu0 0
    %516 = vmatmul.mubr.bf16.gmra.mrb[0].mxu0 %v401
    %v517 = vpop.f32.mrb[0].mxu0
    %v518 = vadd.f32 %v353, %v517
    %v519 = vpop.f32.mrb[0].mxu0
    %v520 = vpop.f32.mrb[0].mxu0
    %v521 = vadd.f32 %v353, %v520
    %v522 = vpop.f32.mrb[0].mxu0
    %523 = vmatprep.mubr.bf16.mxu0 0
    %524 = vmatmul.mubr.bf16.gmra.mrb[0].mxu0 %v404
    %v525 = vpop.f32.mrb[0].mxu0
    %v526 = vadd.f32 %v353, %v525
    %v527 = vpop.f32.mrb[0].mxu0
    %v528 = vpop.f32.mrb[0].mxu0
    %v529 = vadd.f32 %v353, %v528
    %v530 = vpop.f32.mrb[0].mxu0
    %531 = vmatprep.mubr.bf16.mxu0 0
    %532 = vmatmul.mubr.bf16.gmra.mrb[0].mxu0 %v407
    %v533 = vpop.f32.mrb[0].mxu0
    %v534 = vadd.f32 %v353, %v533
    %v535 = vpop.f32.mrb[0].mxu0
    %v536 = vpop.f32.mrb[0].mxu0
    %v537 = vadd.f32 %v353, %v536
    %v538 = vpop.f32.mrb[0].mxu0
    %539 = vmatprep.mubr.bf16.mxu0 0
    %540 = vmatmul.mubr.bf16.gmra.mrb[0].mxu0 %v410
    %v541 = vpop.f32.mrb[0].mxu0
    %v542 = vadd.f32 %v353, %v541
    %v543 = vpop.f32.mrb[0].mxu0
    %v544 = vpop.f32.mrb[0].mxu0
    %v545 = vadd.f32 %v353, %v544
    %v546 = vpop.f32.mrb[0].mxu0
    %547 = vmatprep.mubr.bf16.mxu0 0
    %548 = vmatmul.mubr.bf16.gmra.mrb[0].mxu0 %v413
    %v549 = vpop.f32.mrb[0].mxu0
    %v550 = vadd.f32 %v353, %v549
    %v551 = vpop.f32.mrb[0].mxu0
    %v552 = vpop.f32.mrb[0].mxu0
    %v553 = vadd.f32 %v353, %v552
    %v554 = vpop.f32.mrb[0].mxu0
    %555 = vmatprep.mubr.bf16.mxu0 0
    %556 = vmatmul.mubr.bf16.gmra.mrb[0].mxu0 %v416
    %v557 = vpop.f32.mrb[0].mxu0
    %v558 = vadd.f32 %v353, %v557
    %v559 = vpop.f32.mrb[0].mxu0
    %v560 = vpop.f32.mrb[0].mxu0
    %v561 = vadd.f32 %v353, %v560
    %v562 = vpop.f32.mrb[0].mxu0
    %563 = vmatprep.mubr.bf16.mxu0 0
    %564 = vmatmul.mubr.bf16.gmra.mrb[0].mxu0 %v419
    %v565 = vpop.f32.mrb[0].mxu0
    %v566 = vadd.f32 %v353, %v565
    %v567 = vpop.f32.mrb[0].mxu0
    %v568 = vpop.f32.mrb[0].mxu0
    %v569 = vadd.f32 %v353, %v568
    %v570 = vpop.f32.mrb[0].mxu0
    %571 = vmatprep.mubr.bf16.mxu0 0
    %572 = vmatmul.mubr.bf16.gmra.mrb[0].mxu0 %v422
    %v573 = vpop.f32.mrb[0].mxu0
    %v574 = vadd.f32 %v353, %v573
    %v575 = vpop.f32.mrb[0].mxu0
    %v576 = vpop.f32.mrb[0].mxu0
    %v577 = vadd.f32 %v353, %v576
    %v578 = vpop.f32.mrb[0].mxu0
    %579 = vmatprep.mubr.bf16.mxu0 0
    %580 = vmatmul.mubr.bf16.gmra.mrb[0].mxu0 %v425
    %v581 = vpop.f32.mrb[0].mxu0
    %v582 = vadd.f32 %v353, %v581
    %v583 = vpop.f32.mrb[0].mxu0
    %v584 = vpop.f32.mrb[0].mxu0
    %v585 = vadd.f32 %v353, %v584
    %v586 = vpop.f32.mrb[0].mxu0
    %587 = vdwg.mxu0
    %v588 = vmax.f32 %v462, 0.0
    %v589 = vmax.f32 %v465, 0.0
    %v590 = vmax.f32 %v470, 0.0
    %v591 = vmax.f32 %v473, 0.0
    %v592 = vmax.f32 %v478, 0.0
    %v593 = vmax.f32 %v481, 0.0
    %v594 = vmax.f32 %v486, 0.0
    %v595 = vmax.f32 %v489, 0.0
    %v596 = vmax.f32 %v494, 0.0
    %v597 = vmax.f32 %v497, 0.0
    %v598 = vmax.f32 %v502, 0.0
    %v599 = vmax.f32 %v505, 0.0
    %v600 = vmax.f32 %v510, 0.0
    %v601 = vmax.f32 %v513, 0.0
    %v602 = vmax.f32 %v518, 0.0
    %v603 = vmax.f32 %v521, 0.0
    %v604 = vmax.f32 %v526, 0.0
    %v605 = vmax.f32 %v529, 0.0
    %v606 = vmax.f32 %v534, 0.0
    %v607 = vmax.f32 %v537, 0.0
    %v608 = vmax.f32 %v542, 0.0
    %v609 = vmax.f32 %v545, 0.0
    %v610 = vmax.f32 %v550, 0.0
    %v611 = vmax.f32 %v553, 0.0
    %v612 = vmax.f32 %v558, 0.0
    %v613 = vmax.f32 %v561, 0.0
    %v614 = vmax.f32 %v566, 0.0
    %v615 = vmax.f32 %v569, 0.0
    %v616 = vmax.f32 %v574, 0.0
    %v617 = vmax.f32 %v577, 0.0
    %v618 = vmax.f32 %v582, 0.0
    %v619 = vmax.f32 %v585, 0.0
    %v620 = vpack.c.bf16 %v589, %v588
    %v621 = vpack.c.bf16 %v591, %v590
    %v622 = vpack.c.bf16 %v593, %v592
    %v623 = vpack.c.bf16 %v595, %v594
    %v624 = vpack.c.bf16 %v597, %v596
    %v625 = vpack.c.bf16 %v599, %v598
    %v626 = vpack.c.bf16 %v601, %v600
    %v627 = vpack.c.bf16 %v603, %v602
    %v628 = vpack.c.bf16 %v605, %v604
    %v629 = vpack.c.bf16 %v607, %v606
    %v630 = vpack.c.bf16 %v609, %v608
    %v631 = vpack.c.bf16 %v611, %v610
    %v632 = vpack.c.bf16 %v613, %v612
    %v633 = vpack.c.bf16 %v615, %v614
    %v634 = vpack.c.bf16 %v617, %v616
    %v635 = vpack.c.bf16 %v619, %v618
    %v636 = vld [vmem:[%s2 + $0x20] sm:$0xf]
    %v637 = vld [vmem:[%s2 + $0x24] sm:$0xf]
    %v638 = vld [vmem:[%s2 + $0x28] sm:$0xf]
    %v639 = vld [vmem:[%s2 + $0x2c] sm:$0xf]
    %v640 = vld [vmem:[%s2 + $0x30] sm:$0xf]
    %v641 = vld [vmem:[%s2 + $0x34] sm:$0xf]
    %v642 = vld [vmem:[%s2 + $0x38] sm:$0xf]
    %v643 = vld [vmem:[%s2 + $0x3c] sm:$0xf]
    %v652 = vunpack.c.l.b16 %v636
    %v653 = vunpack.c.l.b16 %v637
    %v654 = vunpack.c.l.b16 %v638
    %v655 = vunpack.c.l.b16 %v639
    %v656 = vunpack.c.l.b16 %v640
    %v657 = vunpack.c.l.b16 %v641
    %v658 = vunpack.c.l.b16 %v642
    %v659 = vunpack.c.l.b16 %v643
    %v660 = vpack.c.b16 %v653, %v652
    %v661 = vpack.c.b16 %v655, %v654
    %v662 = vpack.c.b16 %v657, %v656
    %v663 = vpack.c.b16 %v659, %v658
    %700 = vrot.lane.b32.xlu0 %v167, 64
    %v701 = vpop.permute.xlu0 %700
    %702 = vrot.lane.b32.xlu0 %v170, 64
    %v703 = vpop.permute.xlu0 %702
    %704 = vrot.lane.b32.xlu0 %v175, 64
    %v705 = vpop.permute.xlu0 %704
    %706 = vrot.lane.b32.xlu0 %v178, 64
    %v707 = vpop.permute.xlu0 %706
    %708 = vrot.lane.b32.xlu0 %v183, 64
    %v709 = vpop.permute.xlu0 %708
    %710 = vrot.lane.b32.xlu0 %v186, 64
    %v711 = vpop.permute.xlu0 %710
    %712 = vrot.lane.b32.xlu0 %v191, 64
    %v713 = vpop.permute.xlu0 %712
    %714 = vrot.lane.b32.xlu0 %v194, 64
    %v715 = vpop.permute.xlu0 %714
    %716 = vrot.lane.b32.xlu0 %v199, 64
    %v717 = vpop.permute.xlu0 %716
    %718 = vrot.lane.b32.xlu0 %v202, 64
    %v719 = vpop.permute.xlu0 %718
    %720 = vrot.lane.b32.xlu0 %v207, 64
    %v721 = vpop.permute.xlu0 %720
    %722 = vrot.lane.b32.xlu0 %v210, 64
    %v723 = vpop.permute.xlu0 %722
    %724 = vrot.lane.b32.xlu0 %v215, 64
    %v725 = vpop.permute.xlu0 %724
    %726 = vrot.lane.b32.xlu0 %v218, 64
    %v727 = vpop.permute.xlu0 %726
    %728 = vrot.lane.b32.xlu0 %v223, 64
    %v729 = vpop.permute.xlu0 %728
    %730 = vrot.lane.b32.xlu0 %v226, 64
    %v731 = vpop.permute.xlu0 %730
    %732 = vrot.lane.b32.xlu0 %v231, 64
    %v733 = vpop.permute.xlu0 %732
    %734 = vrot.lane.b32.xlu0 %v234, 64
    %v735 = vpop.permute.xlu0 %734
    %736 = vrot.lane.b32.xlu0 %v239, 64
    %v737 = vpop.permute.xlu0 %736
    %738 = vrot.lane.b32.xlu0 %v242, 64
    %v739 = vpop.permute.xlu0 %738
    %740 = vrot.lane.b32.xlu0 %v247, 64
    %v741 = vpop.permute.xlu0 %740
    %742 = vrot.lane.b32.xlu0 %v250, 64
    %v743 = vpop.permute.xlu0 %742
    %744 = vrot.lane.b32.xlu0 %v255, 64
    %v745 = vpop.permute.xlu0 %744
    %746 = vrot.lane.b32.xlu0 %v258, 64
    %v747 = vpop.permute.xlu0 %746
    %748 = vrot.lane.b32.xlu0 %v263, 64
    %v749 = vpop.permute.xlu0 %748
    %750 = vrot.lane.b32.xlu0 %v266, 64
    %v751 = vpop.permute.xlu0 %750
    %752 = vrot.lane.b32.xlu0 %v271, 64
    %v753 = vpop.permute.xlu0 %752
    %754 = vrot.lane.b32.xlu0 %v274, 64
    %v755 = vpop.permute.xlu0 %754
    %756 = vrot.lane.b32.xlu0 %v279, 64
    %v757 = vpop.permute.xlu0 %756
    %758 = vrot.lane.b32.xlu0 %v282, 64
    %v759 = vpop.permute.xlu0 %758
    %760 = vrot.lane.b32.xlu0 %v287, 64
    %v761 = vpop.permute.xlu0 %760
    %762 = vrot.lane.b32.xlu0 %v290, 64
    %v763 = vpop.permute.xlu0 %762
    %v797 = vsel %vm378, %v620, 0
    %v800 = vsel %vm378, %v621, 0
    %v803 = vsel %vm378, %v622, 0
    %v806 = vsel %vm378, %v623, 0
    %v809 = vsel %vm378, %v624, 0
    %v812 = vsel %vm378, %v625, 0
    %v815 = vsel %vm378, %v626, 0
    %v818 = vsel %vm378, %v627, 0
    %v821 = vsel %vm378, %v628, 0
    %v824 = vsel %vm378, %v629, 0
    %v827 = vsel %vm378, %v630, 0
    %v830 = vsel %vm378, %v631, 0
    %v833 = vsel %vm378, %v632, 0
    %v836 = vsel %vm378, %v633, 0
    %v839 = vsel %vm378, %v634, 0
    %v842 = vsel %vm378, %v635, 0
    %844 = vmatprep.subr.bf16.mxu0 0
    %845 = vmatpush1.bf16.msra.mxu0 %v660
    %846 = vmatprep.subr.bf16.mxu0 0
    %847 = vmatpush1.bf16.msra.mxu0 %v661
    %848 = vmatprep.subr.bf16.mxu0 0
    %849 = vmatpush1.bf16.msra.mxu0 %v662
    %850 = vmatprep.subr.bf16.mxu0 0
    %851 = vmatpush1.bf16.msra.mxu0 %v663
    %852 = vmatprep.subr.bf16.mxu0 0
    %853 = vmatpush1.bf16.msra.mxu0 0
    %854 = vmatprep.subr.bf16.mxu0 0
    %855 = vmatpush1.bf16.msra.mxu0 0
    %856 = vmatprep.subr.bf16.mxu0 0
    %857 = vmatpush1.bf16.msra.mxu0 0
    %858 = vmatprep.subr.bf16.mxu0 0
    %859 = vmatpush1.bf16.msra.mxu0 0
    %860 = vmatprep.subr.bf16.mxu0 0
    %861 = vmatpush1.bf16.msra.mxu0 0
    %862 = vmatprep.subr.bf16.mxu0 0
    %863 = vmatpush1.bf16.msra.mxu0 0
    %864 = vmatprep.subr.bf16.mxu0 0
    %865 = vmatpush1.bf16.msra.mxu0 0
    %866 = vmatprep.subr.bf16.mxu0 0
    %867 = vmatpush1.bf16.msra.mxu0 0
    %868 = vmatprep.subr.bf16.mxu0 0
    %869 = vmatpush1.bf16.msra.mxu0 0
    %870 = vmatprep.subr.bf16.mxu0 0
    %871 = vmatpush1.bf16.msra.mxu0 0
    %872 = vmatprep.subr.bf16.mxu0 0
    %873 = vmatpush1.bf16.msra.mxu0 0
    %874 = vmatprep.subr.bf16.mxu0 0
    %875 = vmatpush1.bf16.msra.mxu0 0
    %876 = vmatprep.mubr.bf16.mxu0 0
    %877 = vmatmul.mubr.bf16.gmra.mrb[0].mxu0 %v797
    %v878 = vpop.f32.mrb[0].mxu0
    %v879 = vadd.f32 %v701, %v878
    %v880 = vpop.f32.mrb[0].mxu0
    %v881 = vpop.f32.mrb[0].mxu0
    %v882 = vadd.f32 %v703, %v881
    %v883 = vpop.f32.mrb[0].mxu0
    %884 = vmatprep.mubr.bf16.mxu0 0
    %885 = vmatmul.mubr.bf16.gmra.mrb[0].mxu0 %v800
    %v886 = vpop.f32.mrb[0].mxu0
    %v887 = vadd.f32 %v705, %v886
    %v888 = vpop.f32.mrb[0].mxu0
    %v889 = vpop.f32.mrb[0].mxu0
    %v890 = vadd.f32 %v707, %v889
    %v891 = vpop.f32.mrb[0].mxu0
    %892 = vmatprep.mubr.bf16.mxu0 0
    %893 = vmatmul.mubr.bf16.gmra.mrb[0].mxu0 %v803
    %v894 = vpop.f32.mrb[0].mxu0
    %v895 = vadd.f32 %v709, %v894
    %v896 = vpop.f32.mrb[0].mxu0
    %v897 = vpop.f32.mrb[0].mxu0
    %v898 = vadd.f32 %v711, %v897
    %v899 = vpop.f32.mrb[0].mxu0
    %900 = vmatprep.mubr.bf16.mxu0 0
    %901 = vmatmul.mubr.bf16.gmra.mrb[0].mxu0 %v806
    %v902 = vpop.f32.mrb[0].mxu0
    %v903 = vadd.f32 %v713, %v902
    %v904 = vpop.f32.mrb[0].mxu0
    %v905 = vpop.f32.mrb[0].mxu0
    %v906 = vadd.f32 %v715, %v905
    %v907 = vpop.f32.mrb[0].mxu0
    %908 = vmatprep.mubr.bf16.mxu0 0
    %909 = vmatmul.mubr.bf16.gmra.mrb[0].mxu0 %v809
    %v910 = vpop.f32.mrb[0].mxu0
    %v911 = vadd.f32 %v717, %v910
    %v912 = vpop.f32.mrb[0].mxu0
    %v913 = vpop.f32.mrb[0].mxu0
    %v914 = vadd.f32 %v719, %v913
    %v915 = vpop.f32.mrb[0].mxu0
    %916 = vmatprep.mubr.bf16.mxu0 0
    %917 = vmatmul.mubr.bf16.gmra.mrb[0].mxu0 %v812
    %v918 = vpop.f32.mrb[0].mxu0
    %v919 = vadd.f32 %v721, %v918
    %v920 = vpop.f32.mrb[0].mxu0
    %v921 = vpop.f32.mrb[0].mxu0
    %v922 = vadd.f32 %v723, %v921
    %v923 = vpop.f32.mrb[0].mxu0
    %924 = vmatprep.mubr.bf16.mxu0 0
    %925 = vmatmul.mubr.bf16.gmra.mrb[0].mxu0 %v815
    %v926 = vpop.f32.mrb[0].mxu0
    %v927 = vadd.f32 %v725, %v926
    %v928 = vpop.f32.mrb[0].mxu0
    %v929 = vpop.f32.mrb[0].mxu0
    %v930 = vadd.f32 %v727, %v929
    %v931 = vpop.f32.mrb[0].mxu0
    %932 = vmatprep.mubr.bf16.mxu0 0
    %933 = vmatmul.mubr.bf16.gmra.mrb[0].mxu0 %v818
    %v934 = vpop.f32.mrb[0].mxu0
    %v935 = vadd.f32 %v729, %v934
    %v936 = vpop.f32.mrb[0].mxu0
    %v937 = vpop.f32.mrb[0].mxu0
    %v938 = vadd.f32 %v731, %v937
    %v939 = vpop.f32.mrb[0].mxu0
    %940 = vmatprep.mubr.bf16.mxu0 0
    %941 = vmatmul.mubr.bf16.gmra.mrb[0].mxu0 %v821
    %v942 = vpop.f32.mrb[0].mxu0
    %v943 = vadd.f32 %v733, %v942
    %v944 = vpop.f32.mrb[0].mxu0
    %v945 = vpop.f32.mrb[0].mxu0
    %v946 = vadd.f32 %v735, %v945
    %v947 = vpop.f32.mrb[0].mxu0
    %948 = vmatprep.mubr.bf16.mxu0 0
    %949 = vmatmul.mubr.bf16.gmra.mrb[0].mxu0 %v824
    %v950 = vpop.f32.mrb[0].mxu0
    %v951 = vadd.f32 %v737, %v950
    %v952 = vpop.f32.mrb[0].mxu0
    %v953 = vpop.f32.mrb[0].mxu0
    %v954 = vadd.f32 %v739, %v953
    %v955 = vpop.f32.mrb[0].mxu0
    %956 = vmatprep.mubr.bf16.mxu0 0
    %957 = vmatmul.mubr.bf16.gmra.mrb[0].mxu0 %v827
    %v958 = vpop.f32.mrb[0].mxu0
    %v959 = vadd.f32 %v741, %v958
    %v960 = vpop.f32.mrb[0].mxu0
    %v961 = vpop.f32.mrb[0].mxu0
    %v962 = vadd.f32 %v743, %v961
    %v963 = vpop.f32.mrb[0].mxu0
    %964 = vmatprep.mubr.bf16.mxu0 0
    %965 = vmatmul.mubr.bf16.gmra.mrb[0].mxu0 %v830
    %v966 = vpop.f32.mrb[0].mxu0
    %v967 = vadd.f32 %v745, %v966
    %v968 = vpop.f32.mrb[0].mxu0
    %v969 = vpop.f32.mrb[0].mxu0
    %v970 = vadd.f32 %v747, %v969
    %v971 = vpop.f32.mrb[0].mxu0
    %972 = vmatprep.mubr.bf16.mxu0 0
    %973 = vmatmul.mubr.bf16.gmra.mrb[0].mxu0 %v833
    %v974 = vpop.f32.mrb[0].mxu0
    %v975 = vadd.f32 %v749, %v974
    %v976 = vpop.f32.mrb[0].mxu0
    %v977 = vpop.f32.mrb[0].mxu0
    %v978 = vadd.f32 %v751, %v977
    %v979 = vpop.f32.mrb[0].mxu0
    %980 = vmatprep.mubr.bf16.mxu0 0
    %981 = vmatmul.mubr.bf16.gmra.mrb[0].mxu0 %v836
    %v982 = vpop.f32.mrb[0].mxu0
    %v983 = vadd.f32 %v753, %v982
    %v984 = vpop.f32.mrb[0].mxu0
    %v985 = vpop.f32.mrb[0].mxu0
    %v986 = vadd.f32 %v755, %v985
    %v987 = vpop.f32.mrb[0].mxu0
    %988 = vmatprep.mubr.bf16.mxu0 0
    %989 = vmatmul.mubr.bf16.gmra.mrb[0].mxu0 %v839
    %v990 = vpop.f32.mrb[0].mxu0
    %v991 = vadd.f32 %v757, %v990
    %v992 = vpop.f32.mrb[0].mxu0
    %v993 = vpop.f32.mrb[0].mxu0
    %v994 = vadd.f32 %v759, %v993
    %v995 = vpop.f32.mrb[0].mxu0
    %996 = vmatprep.mubr.bf16.mxu0 0
    %997 = vmatmul.mubr.bf16.gmra.mrb[0].mxu0 %v842
    %v998 = vpop.f32.mrb[0].mxu0
    %v999 = vadd.f32 %v761, %v998
    %v1000 = vpop.f32.mrb[0].mxu0
    %v1001 = vpop.f32.mrb[0].mxu0
    %v1002 = vadd.f32 %v763, %v1001
    %v1003 = vpop.f32.mrb[0].mxu0
    %1004 = vdwg.mxu0
    %1006 = vrot.lane.b32.xlu0 %v353, 64
    %v1007 = vpop.permute.xlu0 %1006
    %v1009 = vadd.f32 %v879, %v1007
    %v1010 = vadd.f32 %v882, %v1007
    %v1011 = vadd.f32 %v887, %v1007
    %v1012 = vadd.f32 %v890, %v1007
    %v1013 = vadd.f32 %v895, %v1007
    %v1014 = vadd.f32 %v898, %v1007
    %v1015 = vadd.f32 %v903, %v1007
    %v1016 = vadd.f32 %v906, %v1007
    %v1017 = vadd.f32 %v911, %v1007
    %v1018 = vadd.f32 %v914, %v1007
    %v1019 = vadd.f32 %v919, %v1007
    %v1020 = vadd.f32 %v922, %v1007
    %v1021 = vadd.f32 %v927, %v1007
    %v1022 = vadd.f32 %v930, %v1007
    %v1023 = vadd.f32 %v935, %v1007
    %v1024 = vadd.f32 %v938, %v1007
    %v1025 = vadd.f32 %v943, %v1007
    %v1026 = vadd.f32 %v946, %v1007
    %v1027 = vadd.f32 %v951, %v1007
    %v1028 = vadd.f32 %v954, %v1007
    %v1029 = vadd.f32 %v959, %v1007
    %v1030 = vadd.f32 %v962, %v1007
    %v1031 = vadd.f32 %v967, %v1007
    %v1032 = vadd.f32 %v970, %v1007
    %v1033 = vadd.f32 %v975, %v1007
    %v1034 = vadd.f32 %v978, %v1007
    %v1035 = vadd.f32 %v983, %v1007
    %v1036 = vadd.f32 %v986, %v1007
    %v1037 = vadd.f32 %v991, %v1007
    %v1038 = vadd.f32 %v994, %v1007
    %v1039 = vadd.f32 %v999, %v1007
    %v1040 = vadd.f32 %v1002, %v1007
    %v1041 = vmax.f32 %v1009, 0.0
    %v1042 = vmax.f32 %v1010, 0.0
    %v1043 = vmax.f32 %v1011, 0.0
    %v1044 = vmax.f32 %v1012, 0.0
    %v1045 = vmax.f32 %v1013, 0.0
    %v1046 = vmax.f32 %v1014, 0.0
    %v1047 = vmax.f32 %v1015, 0.0
    %v1048 = vmax.f32 %v1016, 0.0
    %v1049 = vmax.f32 %v1017, 0.0
    %v1050 = vmax.f32 %v1018, 0.0
    %v1051 = vmax.f32 %v1019, 0.0
    %v1052 = vmax.f32 %v1020, 0.0
    %v1053 = vmax.f32 %v1021, 0.0
    %v1054 = vmax.f32 %v1022, 0.0
    %v1055 = vmax.f32 %v1023, 0.0
    %v1056 = vmax.f32 %v1024, 0.0
    %v1057 = vmax.f32 %v1025, 0.0
    %v1058 = vmax.f32 %v1026, 0.0
    %v1059 = vmax.f32 %v1027, 0.0
    %v1060 = vmax.f32 %v1028, 0.0
    %v1061 = vmax.f32 %v1029, 0.0
    %v1062 = vmax.f32 %v1030, 0.0
    %v1063 = vmax.f32 %v1031, 0.0
    %v1064 = vmax.f32 %v1032, 0.0
    %v1065 = vmax.f32 %v1033, 0.0
    %v1066 = vmax.f32 %v1034, 0.0
    %v1067 = vmax.f32 %v1035, 0.0
    %v1068 = vmax.f32 %v1036, 0.0
    %v1069 = vmax.f32 %v1037, 0.0
    %v1070 = vmax.f32 %v1038, 0.0
    %v1071 = vmax.f32 %v1039, 0.0
    %v1072 = vmax.f32 %v1040, 0.0
    %1073 = vxpose.xlu0.b32.start [1/16] %v1041, 128
    %1074 = vxpose.xlu0.b32.cont [2/16] %v1042, 128
    %1075 = vxpose.xlu0.b32.cont [3/16] %v1043, 128
    %1076 = vxpose.xlu0.b32.cont [4/16] %v1044, 128
    %1077 = vxpose.xlu0.b32.cont [5/16] %v1045, 128
    %1078 = vxpose.xlu0.b32.cont [6/16] %v1046, 128
    %1079 = vxpose.xlu0.b32.cont [7/16] %v1047, 128
    %1080 = vxpose.xlu0.b32.cont [8/16] %v1048, 128
    %1081 = vxpose.xlu0.b32.cont [9/16] %v1049, 128
    %1082 = vxpose.xlu0.b32.cont [10/16] %v1050, 128
    %1083 = vxpose.xlu0.b32.cont [11/16] %v1051, 128
    %1084 = vxpose.xlu0.b32.cont [12/16] %v1052, 128
    %1085 = vxpose.xlu0.b32.cont [13/16] %v1053, 128
    %1086 = vxpose.xlu0.b32.cont [14/16] %v1054, 128
    %1087 = vxpose.xlu0.b32.cont [15/16] %v1055, 128
    %1088 = vxpose.xlu0.b32.end [16/16] %v1056, 128
    %v1089 = vpop.trf.xlu0
    %v1090 = vpop.trf.xlu0
    %v1091 = vpop.trf.xlu0
    %v1092 = vpop.trf.xlu0
    %v1093 = vpop.trf.xlu0
    %v1094 = vpop.trf.xlu0
    %v1095 = vpop.trf.xlu0
    %v1096 = vpop.trf.xlu0
    %v1097 = vpop.trf.xlu0
    %v1098 = vpop.trf.xlu0
    %v1099 = vpop.trf.xlu0
    %v1100 = vpop.trf.xlu0
    %v1101 = vpop.trf.xlu0
    %v1102 = vpop.trf.xlu0
    %v1103 = vpop.trf.xlu0
    %v1104 = vpop.trf.xlu0
    %1105 = vxpose.xlu0.b32.start [1/16] %v1057, 128
    %1106 = vxpose.xlu0.b32.cont [2/16] %v1058, 128
    %1107 = vxpose.xlu0.b32.cont [3/16] %v1059, 128
    %1108 = vxpose.xlu0.b32.cont [4/16] %v1060, 128
    %1109 = vxpose.xlu0.b32.cont [5/16] %v1061, 128
    %1110 = vxpose.xlu0.b32.cont [6/16] %v1062, 128
    %1111 = vxpose.xlu0.b32.cont [7/16] %v1063, 128
    %1112 = vxpose.xlu0.b32.cont [8/16] %v1064, 128
    %1113 = vxpose.xlu0.b32.cont [9/16] %v1065, 128
    %1114 = vxpose.xlu0.b32.cont [10/16] %v1066, 128
    %1115 = vxpose.xlu0.b32.cont [11/16] %v1067, 128
    %1116 = vxpose.xlu0.b32.cont [12/16] %v1068, 128
    %1117 = vxpose.xlu0.b32.cont [13/16] %v1069, 128
    %1118 = vxpose.xlu0.b32.cont [14/16] %v1070, 128
    %1119 = vxpose.xlu0.b32.cont [15/16] %v1071, 128
    %1120 = vxpose.xlu0.b32.end [16/16] %v1072, 128
    %v1121 = vpop.trf.xlu0
    %v1122 = vpop.trf.xlu0
    %v1123 = vpop.trf.xlu0
    %v1124 = vpop.trf.xlu0
    %v1125 = vpop.trf.xlu0
    %v1126 = vpop.trf.xlu0
    %v1127 = vpop.trf.xlu0
    %v1128 = vpop.trf.xlu0
    %v1129 = vpop.trf.xlu0
    %v1130 = vpop.trf.xlu0
    %v1131 = vpop.trf.xlu0
    %v1132 = vpop.trf.xlu0
    %v1133 = vpop.trf.xlu0
    %v1134 = vpop.trf.xlu0
    %v1135 = vpop.trf.xlu0
    %v1136 = vpop.trf.xlu0
    %v1137 = vpack.c.bf16 %v1090, %v1089
    %v1138 = vpack.c.bf16 %v1122, %v1121
    %v1139 = vpack.c.bf16 %v1092, %v1091
    %v1140 = vpack.c.bf16 %v1124, %v1123
    %v1141 = vpack.c.bf16 %v1094, %v1093
    %v1142 = vpack.c.bf16 %v1126, %v1125
    %v1143 = vpack.c.bf16 %v1096, %v1095
    %v1144 = vpack.c.bf16 %v1128, %v1127
    %v1145 = vld [vmem:[%s3] sm:$0x1]
    %v1146 = vld [vmem:[%s5] sm:$0x3]
    %1148 = vset.pattern.permute.xlu0 0
    %1149 = vperm.xlu0 %1148, %v1146
    %v1150 = vpop.permute.xlu0 %1149
    %v1153 = vsel %vm378, %v1145, 0
    %1155 = vmatprep.subr.bf16.mxu0 %v1138
    %1156 = vmatpush1.bf16.msra.mxu0 %v1137
    %1157 = vmatprep.subr.bf16.mxu0 %v1140
    %1158 = vmatpush1.bf16.msra.mxu0 %v1139
    %1159 = vmatprep.subr.bf16.mxu0 %v1142
    %1160 = vmatpush1.bf16.msra.mxu0 %v1141
    %1161 = vmatprep.subr.bf16.mxu0 %v1144
    %1162 = vmatpush1.bf16.msra.mxu0 %v1143
    %1163 = vmatprep.subr.bf16.mxu0 0
    %1164 = vmatpush1.bf16.msra.mxu0 0
    %1165 = vmatprep.subr.bf16.mxu0 0
    %1166 = vmatpush1.bf16.msra.mxu0 0
    %1167 = vmatprep.subr.bf16.mxu0 0
    %1168 = vmatpush1.bf16.msra.mxu0 0
    %1169 = vmatprep.subr.bf16.mxu0 0
    %1170 = vmatpush1.bf16.msra.mxu0 0
    %1171 = vmatprep.subr.bf16.mxu0 0
    %1172 = vmatpush1.bf16.msra.mxu0 0
    %1173 = vmatprep.subr.bf16.mxu0 0
    %1174 = vmatpush1.bf16.msra.mxu0 0
    %1175 = vmatprep.subr.bf16.mxu0 0
    %1176 = vmatpush1.bf16.msra.mxu0 0
    %1177 = vmatprep.subr.bf16.mxu0 0
    %1178 = vmatpush1.bf16.msra.mxu0 0
    %1179 = vmatprep.subr.bf16.mxu0 0
    %1180 = vmatpush1.bf16.msra.mxu0 0
    %1181 = vmatprep.subr.bf16.mxu0 0
    %1182 = vmatpush1.bf16.msra.mxu0 0
    %1183 = vmatprep.subr.bf16.mxu0 0
    %1184 = vmatpush1.bf16.msra.mxu0 0
    %1185 = vmatprep.subr.bf16.mxu0 0
    %1186 = vmatpush1.bf16.msra.mxu0 0
    %1187 = vmatprep.mubr.bf16.mxu0 0
    %1188 = vmatmul.mubr.bf16.gmra.mrb[0].mxu0 %v1153
    %v1189 = vpop.f32.mrb[0].mxu0
    %v1190 = vadd.f32 %v1150, %v1189
    %v1191 = vpop.f32.mrb[0].mxu0
    %v1192 = vadd.f32 %v1150, %v1191
    %v1193 = vpop.f32.mrb[0].mxu0
    %v1194 = vpop.f32.mrb[0].mxu0
    %1195 = vdwg.mxu0
    %v1198 = vcombine.low %v1190, %v1192
    %v1200 = vunpack.c.l.s4 1983009808
    %v1201 = vunpack.c.0.s8 %v1200
    %v1202 = vlaneseq
    %v1203 = vshrl.u32 %v1202, 7
    %v1204 = vsub.s32 %v1201, %v1203
    %v1205 = vrot.slane %v1198, %v1204
    %1207 = vst [vmem:[#allocation2] sm:$0xf] %v1205
    // Predicated region
    $region26: #{tpu_custom_call.1} parent=1 // pred_check
      _
    $region27: #{tpu_custom_call.1} parent=1 // pred_check_branch
      %1209 = sbr.rel (0) target = $region29
    $region28: #{tpu_custom_call.1} parent=1 // pred_region
      %s1211 = ssub.s32 64, 64
      %1212 = vsyncadd [#allocation3], %s1211
      %s1214 = sshll.u32 [#allocation2], 4
      %s1215 = int_to_ptr.vmem [resolvable:$true] %s1214
      %1217 = dma.vmem_to_hbm [thread:$0]  %s1215, 64, %s6, [#allocation3]
    $region29: #{tpu_custom_call.1} parent=1 // pred_fallthru
      _
    // Predicated region
    $region30: #{tpu_custom_call.1} parent=1 // pred_check
      _
    $region31: #{tpu_custom_call.1} parent=1 // pred_check_branch
      %1219 = sbr.rel (0) target = $region33
    $region32: #{tpu_custom_call.1} parent=1 // pred_region
      %1220 = dma.done [#allocation3], 64
    $region33: #{tpu_custom_call.1} parent=1 // pred_fallthru
      _
    %1221 = vsyncpa [#allocation3], 1

</llo_original>
